<compile_context>
chip_gen: v6e
topology: v6e:2x2x1
jax: 0.10.0
libtpu: 0.0.40
codegen_flags: <defaults>
</compile_context>

<pallas_src>
import functools

import jax
import jax.numpy as jnp
import numpy as np
from jax import lax
from jax.experimental import pallas as pl
from jax.experimental.pallas import tpu as pltpu


# ---------------------------------------------------------------------------
# Tiling knobs
# ---------------------------------------------------------------------------
_MIN_TILE_AREA = 16 * 1024    # elements: enough independent vregs for ILP
_MAX_TILE_AREA = 64 * 1024    # elements: bound spill / vld pressure (esp. v5e)
_MAX_TILE_LANES = 1024        # lane-tile cap (multiple of 128 -> unmasked vst)
_DEPTH_UNROLL_LIMIT = 8       # full Python unroll up to this many depth steps


def _tile_footprint_bytes(tm, tn, num_values):
    # num_values hoisted (TM, TN) int32 child-code maps + ~6 full-tile working
    # temps (x/y broadcast, coord, left, idx, new_idx) + double-buffered int32
    # output block; the (TM,1)/(1,TN) coordinate blocks are negligible.
    return tm * tn * 4 * (num_values + 6) + 2 * tm * tn * 4


def _vmem_capacity_bytes():
    try:
        cap = int(pltpu.get_tpu_info().vmem_capacity_bytes)
        if cap > 0:
            return cap
    except Exception:
        pass
    return 64 * 1024 * 1024   # conservative fallback (v7x per-core VMEM)


def _pick_tiles(nx, ny, num_values, vmem_budget_bytes):
    """(TM, TN): TM multiple of 8 dividing nx, TN multiple of 128 dividing ny."""
    tn = 128
    cand = 128
    while cand <= min(ny, _MAX_TILE_LANES):
        if ny % cand == 0:
            tn = cand
        cand += 128

    tm = 8
    for cand in range(8, nx + 1, 8):
        if cand * tn > _MAX_TILE_AREA:
            break
        if nx % cand != 0:
            continue
        if _tile_footprint_bytes(cand, tn, num_values) <= vmem_budget_bytes:
            tm = cand
    return tm, tn


def _prefer_two_steps(nx, ny, tm, tn):
    """Split a single-step grid so both v7x TensorCores get work."""
    if (nx // tm) * (ny // tn) > 1:
        return tm, tn
    if nx * ny < 2 * _MIN_TILE_AREA:
        return tm, tn            # tiny problem; splitting only adds overhead
    if tm % 16 == 0:
        return tm // 2, tn
    if tn % 256 == 0:
        return tm, tn // 2
    return tm, tn


# ---------------------------------------------------------------------------
# Pallas kernel
# ---------------------------------------------------------------------------
def fractal_kernel(sp_ref, dir_ref, code_ref, cleft_ref, cright_ref,
                   x_ref, y_ref, out_ref, *, max_depth, num_values):
    """One (TM, TN) tile of the point grid (requires max_depth >= 1).

    sp_ref:     SMEM f32[num_values]  split points
    dir_ref:    SMEM i32[num_values]  split directions (0=horizontal, 1=vertical)
    code_ref:   SMEM i32[num_values]  packed code of value v: (classes[v]<<16)|v
    cleft_ref:  SMEM i32[num_values]  packed code of left child of v
    cright_ref: SMEM i32[num_values]  packed code of right child of v
    x_ref:      VMEM f32[TM, 1]       x coordinate of each row of the tile
    y_ref:      VMEM f32[1, TN]       y coordinate of each column of the tile
    out_ref:    VMEM i32[TM, TN]      final class per point
    """
    tm, tn = out_ref.shape
    x_full = jnp.broadcast_to(x_ref[...], (tm, tn))   # hoisted, once per tile
    y_full = jnp.broadcast_to(y_ref[...], (tm, tn))

    # ---- Hoisted, depth-invariant per-value work (SMEM scalars read once).
    # next_full[v]: packed child code a point currently at value v moves to.
    next_full = []
    codes = []
    for v in range(num_values):
        sp_v = sp_ref[v]
        is_h = dir_ref[v] == 0
        coord = jnp.where(is_h, x_full, y_full)                  # 1 select
        left = coord < sp_v                                      # 1 compare
        next_full.append(jnp.where(left, cleft_ref[v], cright_ref[v]))  # 1 select
        codes.append(code_ref[v])

    def one_depth(idx):
        # idx holds packed codes; points not matching any v>=1 are at value 0.
        new_idx = next_full[0]
        for v in range(1, num_values):
            new_idx = jnp.where(idx == codes[v], next_full[v], new_idx)
        return new_idx

    # Depth 0: every point starts at value 0 -> take its child code directly.
    idx = next_full[0]
    remaining = max_depth - 1
    if remaining <= _DEPTH_UNROLL_LIMIT:
        for _ in range(remaining):
            idx = one_depth(idx)
    else:
        idx = lax.fori_loop(0, remaining, lambda _, i: one_depth(i), idx,
                            unroll=2)

    # Fused class lookup: high 16 bits of the packed code are the class.
    out_ref[...] = idx >> 16


# ---------------------------------------------------------------------------
# Wrapper
# ---------------------------------------------------------------------------
def fractal2d_forward(max_depth, split_points, split_directions,
                      left_children, right_children, classes,
                      x_coords, y_coords, *, tile_rows=None, tile_cols=None):
    """x_coords: (nx,) f32, y_coords: (ny,) f32 -> int32 (nx, ny) class map."""
    num_values = int(split_points.shape[0])
    nx = int(x_coords.shape[0])
    ny = int(y_coords.shape[0])
    assert nx % 8 == 0, "num_points_x must be a multiple of 8"
    assert ny % 128 == 0, "num_points_y must be a multiple of 128"

    classes = jnp.asarray(classes, jnp.int32)
    left_children = jnp.asarray(left_children, jnp.int32)
    right_children = jnp.asarray(right_children, jnp.int32)

    if int(max_depth) == 0:
        # No transitions: every point stays at value 0.
        return jnp.full((nx, ny), classes[0], dtype=jnp.int32)

    # Packed child codes: code(w) = (classes[w] << 16) | w.  The kernel tracks
    # packed codes and finishes with a single shift (no class epilogue).
    code = (classes << 16) | jnp.arange(num_values, dtype=jnp.int32)
    code_left = code[left_children]
    code_right = code[right_children]

    vmem_cap = _vmem_capacity_bytes()
    budget = min(vmem_cap // 4, 20 * 1024 * 1024)

    if tile_rows is None or tile_cols is None:
        tm, tn = _pick_tiles(nx, ny, num_values, budget)
        tm, tn = _prefer_two_steps(nx, ny, tm, tn)
    else:
        tm, tn = int(tile_rows), int(tile_cols)
    assert nx % tm == 0 and tm % 8 == 0
    assert ny % tn == 0 and tn % 128 == 0

    footprint = _tile_footprint_bytes(tm, tn, num_values)
    vmem_limit = int(min(max(3 * footprint, 32 * 1024 * 1024),
                         int(0.8 * vmem_cap)))

    kernel = functools.partial(fractal_kernel,
                               max_depth=int(max_depth),
                               num_values=num_values)

    smem_spec = pl.BlockSpec(memory_space=pltpu.MemorySpace.SMEM)
    x_spec = pl.BlockSpec((tm, 1), lambda i, j: (i, 0))
    y_spec = pl.BlockSpec((1, tn), lambda i, j: (0, j))
    out_spec = pl.BlockSpec((tm, tn), lambda i, j: (i, j))

    return pl.pallas_call(
        kernel,
        out_shape=jax.ShapeDtypeStruct((nx, ny), jnp.int32),
        grid=(nx // tm, ny // tn),
        in_specs=[smem_spec, smem_spec, smem_spec, smem_spec, smem_spec,
                  x_spec, y_spec],
        out_specs=out_spec,
        compiler_params=pltpu.CompilerParams(
            dimension_semantics=("parallel", "parallel"),
            vmem_limit_bytes=vmem_limit),
    )(jnp.asarray(split_points, jnp.float32),
      jnp.asarray(split_directions, jnp.int32),
      code, code_left, code_right,
      jnp.asarray(x_coords, jnp.float32).reshape(nx, 1),
      jnp.asarray(y_coords, jnp.float32).reshape(1, ny))


# ---------------------------------------------------------------------------
# Deterministic parameter construction (mirrors Fractal2DNonDiff.__init__)
# ---------------------------------------------------------------------------
def init_fractal_params(num_classes, num_values, key):
    k1, k2, k3, k4, k5 = jax.random.split(key, 5)

    split_points = (jax.random.uniform(k1, (num_values,), jnp.float32)
                    * 0.6 + 0.2)
    split_directions = jax.random.randint(k2, (num_values,), 0, 2,
                                          dtype=jnp.int32)

    min_values_per_class = 2
    values_per_class = num_values // num_classes
    extra_values = num_values % num_classes
    classes_list = []
    for class_idx in range(num_classes):
        class_values = values_per_class + (1 if class_idx < extra_values else 0)
        classes_list.extend([class_idx] * max(class_values, min_values_per_class))
    classes_np = np.array(classes_list[:num_values], dtype=np.int32)
    perm = np.asarray(jax.random.permutation(k3, num_values))
    classes_np = classes_np[perm]

    same_class_direction = np.asarray(
        jax.random.randint(k4, (num_values,), 0, 2, dtype=jnp.int32))

    left_children = np.zeros(num_values, dtype=np.int32)
    right_children = np.zeros(num_values, dtype=np.int32)
    child_keys = jax.random.split(k5, num_values)
    for i in range(num_values):
        row_class = classes_np[i]
        same_idx = np.flatnonzero(classes_np == row_class)
        same_idx = same_idx[same_idx != i]
        diff_idx = np.flatnonzero(classes_np != row_class)
        ka, kb = jax.random.split(child_keys[i])
        si = int(jax.random.randint(ka, (), 0, len(same_idx)))
        di = int(jax.random.randint(kb, (), 0, len(diff_idx)))
        if same_class_direction[i] == 0:
            left_children[i] = same_idx[si]
            right_children[i] = diff_idx[di]
        else:
            left_children[i] = diff_idx[di]
            right_children[i] = same_idx[si]

    return (split_points,
            split_directions,
            jnp.asarray(left_children),
            jnp.asarray(right_children),
            jnp.asarray(classes_np))


# ---------------------------------------------------------------------------
# Pure-JAX reference (same semantics as the torch forward)
# ---------------------------------------------------------------------------
def ref_forward(max_depth, sp, dirs, lc, rc, cls, grid_x, grid_y):
    xp = grid_x.reshape(-1)
    yp = grid_y.reshape(-1)
    idx = jnp.zeros(xp.shape, jnp.int32)
    for _ in range(max_depth):
        d = dirs[idx]
        s = sp[idx]
        is_left = jnp.where(d == 0, xp < s, yp < s)
        idx = jnp.where(is_left, lc[idx], rc[idx])
    return cls[idx].reshape(grid_x.shape)


# ---------------------------------------------------------------------------
# Main
# ---------------------------------------------------------------------------
if __name__ == "__main__":
    num_classes = 3
    num_values = 12

    key = jax.random.PRNGKey(0)
    (split_points, split_directions,
     left_children, right_children, classes) = init_fractal_params(
        num_classes, num_values, key)

    # (nx, ny, max_depth): first config is the small single-tile demo with the
    # unrolled depth path; second exercises a multi-step grid + fori_loop path.
    configs = [
        (16, 128, 6),
        (128, 1024, 10),
    ]

    for nx, ny, max_depth in configs:
        # 1-D coordinates only; the kernel broadcasts internally.
        x = jnp.linspace(0.0, 1.0, nx, dtype=jnp.float32)
        y = jnp.linspace(0.0, 1.0, ny, dtype=jnp.float32)

        out = fractal2d_forward(max_depth, split_points, split_directions,
                                left_children, right_children, classes, x, y)
        out = jax.block_until_ready(out)

        # Reference uses the full meshgrid (indexing='ij'), like the torch module.
        grid_x, grid_y = jnp.meshgrid(x, y, indexing="ij")
        ref = ref_forward(max_depth, split_points, split_directions,
                          left_children, right_children, classes,
                          grid_x, grid_y)

        assert out.shape == (nx, ny)
        assert out.dtype == jnp.int32
        np.testing.assert_array_equal(np.asarray(out), np.asarray(ref))

    print("KERNEL_OK")
</pallas_src>

<mosaic_0001>
module attributes {stable_mosaic.version = 11 : i64} {
  func.func @fractal_kernel(%arg0: i32, %arg1: i32, %arg2: memref<12xf32, #tpu.memory_space<smem>>, %arg3: memref<12xi32, #tpu.memory_space<smem>>, %arg4: memref<12xi32, #tpu.memory_space<smem>>, %arg5: memref<12xi32, #tpu.memory_space<smem>>, %arg6: memref<12xi32, #tpu.memory_space<smem>>, %arg7: memref<16x1xf32, #tpu.memory_space<vmem>>, %arg8: memref<1x128xf32, #tpu.memory_space<vmem>>, %arg9: memref<16x128xi32, #tpu.memory_space<vmem>>) attributes {dimension_semantics = [#tpu.dimension_semantics<parallel>, #tpu.dimension_semantics<parallel>], iteration_bounds = array<i64: 1, 1>, scalar_prefetch = 0 : i64, scratch_operands = 0 : i64, tpu.core_type = #tpu.core_type<tc>, window_params = [{transform_indices = @transform_0, window_bounds = array<i64: 12>}, {transform_indices = @transform_1, window_bounds = array<i64: 12>}, {transform_indices = @transform_2, window_bounds = array<i64: 12>}, {transform_indices = @transform_3, window_bounds = array<i64: 12>}, {transform_indices = @transform_4, window_bounds = array<i64: 12>}, {transform_indices = @transform_5, window_bounds = array<i64: 16, 1>}, {transform_indices = @transform_6, window_bounds = array<i64: 1, 128>}, {transform_indices = @transform_7, window_bounds = array<i64: 16, 128>}]} {
    %c0 = arith.constant 0 : index
    %c0_0 = arith.constant 0 : index
    %0 = vector.load %arg7[%c0, %c0_0] : memref<16x1xf32, #tpu.memory_space<vmem>>, vector<16x1xf32>
    %1 = vector.shape_cast %0 : vector<16x1xf32> to vector<16x1xf32>
    %2 = vector.broadcast %1 : vector<16x1xf32> to vector<16x128xf32>
    %c0_1 = arith.constant 0 : index
    %c0_2 = arith.constant 0 : index
    %3 = vector.load %arg8[%c0_1, %c0_2] : memref<1x128xf32, #tpu.memory_space<vmem>>, vector<1x128xf32>
    %4 = vector.shape_cast %3 : vector<1x128xf32> to vector<1x128xf32>
    %5 = vector.broadcast %4 : vector<1x128xf32> to vector<16x128xf32>
    %c0_3 = arith.constant 0 : index
    %6 = memref.load %arg2[%c0_3] : memref<12xf32, #tpu.memory_space<smem>>
    %c0_4 = arith.constant 0 : index
    %7 = memref.load %arg3[%c0_4] : memref<12xi32, #tpu.memory_space<smem>>
    %c0_i32 = arith.constant 0 : i32
    %8 = arith.cmpi eq, %7, %c0_i32 : i32
    %9 = arith.select %8, %2, %5 : vector<16x128xf32>
    %10 = vector.broadcast %6 : f32 to vector<16x128xf32>
    %11 = arith.cmpf olt, %9, %10 : vector<16x128xf32>
    %c0_5 = arith.constant 0 : index
    %12 = memref.load %arg5[%c0_5] : memref<12xi32, #tpu.memory_space<smem>>
    %c0_6 = arith.constant 0 : index
    %13 = memref.load %arg6[%c0_6] : memref<12xi32, #tpu.memory_space<smem>>
    %14 = vector.broadcast %12 : i32 to vector<16x128xi32>
    %15 = vector.broadcast %13 : i32 to vector<16x128xi32>
    %16 = arith.select %11, %14, %15 : vector<16x128xi1>, vector<16x128xi32>
    %c1 = arith.constant 1 : index
    %17 = memref.load %arg2[%c1] : memref<12xf32, #tpu.memory_space<smem>>
    %c1_7 = arith.constant 1 : index
    %18 = memref.load %arg3[%c1_7] : memref<12xi32, #tpu.memory_space<smem>>
    %c0_i32_8 = arith.constant 0 : i32
    %19 = arith.cmpi eq, %18, %c0_i32_8 : i32
    %20 = arith.select %19, %2, %5 : vector<16x128xf32>
    %21 = vector.broadcast %17 : f32 to vector<16x128xf32>
    %22 = arith.cmpf olt, %20, %21 : vector<16x128xf32>
    %c1_9 = arith.constant 1 : index
    %23 = memref.load %arg5[%c1_9] : memref<12xi32, #tpu.memory_space<smem>>
    %c1_10 = arith.constant 1 : index
    %24 = memref.load %arg6[%c1_10] : memref<12xi32, #tpu.memory_space<smem>>
    %25 = vector.broadcast %23 : i32 to vector<16x128xi32>
    %26 = vector.broadcast %24 : i32 to vector<16x128xi32>
    %27 = arith.select %22, %25, %26 : vector<16x128xi1>, vector<16x128xi32>
    %c1_11 = arith.constant 1 : index
    %28 = memref.load %arg4[%c1_11] : memref<12xi32, #tpu.memory_space<smem>>
    %c2 = arith.constant 2 : index
    %29 = memref.load %arg2[%c2] : memref<12xf32, #tpu.memory_space<smem>>
    %c2_12 = arith.constant 2 : index
    %30 = memref.load %arg3[%c2_12] : memref<12xi32, #tpu.memory_space<smem>>
    %c0_i32_13 = arith.constant 0 : i32
    %31 = arith.cmpi eq, %30, %c0_i32_13 : i32
    %32 = arith.select %31, %2, %5 : vector<16x128xf32>
    %33 = vector.broadcast %29 : f32 to vector<16x128xf32>
    %34 = arith.cmpf olt, %32, %33 : vector<16x128xf32>
    %c2_14 = arith.constant 2 : index
    %35 = memref.load %arg5[%c2_14] : memref<12xi32, #tpu.memory_space<smem>>
    %c2_15 = arith.constant 2 : index
    %36 = memref.load %arg6[%c2_15] : memref<12xi32, #tpu.memory_space<smem>>
    %37 = vector.broadcast %35 : i32 to vector<16x128xi32>
    %38 = vector.broadcast %36 : i32 to vector<16x128xi32>
    %39 = arith.select %34, %37, %38 : vector<16x128xi1>, vector<16x128xi32>
    %c2_16 = arith.constant 2 : index
    %40 = memref.load %arg4[%c2_16] : memref<12xi32, #tpu.memory_space<smem>>
    %c3 = arith.constant 3 : index
    %41 = memref.load %arg2[%c3] : memref<12xf32, #tpu.memory_space<smem>>
    %c3_17 = arith.constant 3 : index
    %42 = memref.load %arg3[%c3_17] : memref<12xi32, #tpu.memory_space<smem>>
    %c0_i32_18 = arith.constant 0 : i32
    %43 = arith.cmpi eq, %42, %c0_i32_18 : i32
    %44 = arith.select %43, %2, %5 : vector<16x128xf32>
    %45 = vector.broadcast %41 : f32 to vector<16x128xf32>
    %46 = arith.cmpf olt, %44, %45 : vector<16x128xf32>
    %c3_19 = arith.constant 3 : index
    %47 = memref.load %arg5[%c3_19] : memref<12xi32, #tpu.memory_space<smem>>
    %c3_20 = arith.constant 3 : index
    %48 = memref.load %arg6[%c3_20] : memref<12xi32, #tpu.memory_space<smem>>
    %49 = vector.broadcast %47 : i32 to vector<16x128xi32>
    %50 = vector.broadcast %48 : i32 to vector<16x128xi32>
    %51 = arith.select %46, %49, %50 : vector<16x128xi1>, vector<16x128xi32>
    %c3_21 = arith.constant 3 : index
    %52 = memref.load %arg4[%c3_21] : memref<12xi32, #tpu.memory_space<smem>>
    %c4 = arith.constant 4 : index
    %53 = memref.load %arg2[%c4] : memref<12xf32, #tpu.memory_space<smem>>
    %c4_22 = arith.constant 4 : index
    %54 = memref.load %arg3[%c4_22] : memref<12xi32, #tpu.memory_space<smem>>
    %c0_i32_23 = arith.constant 0 : i32
    %55 = arith.cmpi eq, %54, %c0_i32_23 : i32
    %56 = arith.select %55, %2, %5 : vector<16x128xf32>
    %57 = vector.broadcast %53 : f32 to vector<16x128xf32>
    %58 = arith.cmpf olt, %56, %57 : vector<16x128xf32>
    %c4_24 = arith.constant 4 : index
    %59 = memref.load %arg5[%c4_24] : memref<12xi32, #tpu.memory_space<smem>>
    %c4_25 = arith.constant 4 : index
    %60 = memref.load %arg6[%c4_25] : memref<12xi32, #tpu.memory_space<smem>>
    %61 = vector.broadcast %59 : i32 to vector<16x128xi32>
    %62 = vector.broadcast %60 : i32 to vector<16x128xi32>
    %63 = arith.select %58, %61, %62 : vector<16x128xi1>, vector<16x128xi32>
    %c4_26 = arith.constant 4 : index
    %64 = memref.load %arg4[%c4_26] : memref<12xi32, #tpu.memory_space<smem>>
    %c5 = arith.constant 5 : index
    %65 = memref.load %arg2[%c5] : memref<12xf32, #tpu.memory_space<smem>>
    %c5_27 = arith.constant 5 : index
    %66 = memref.load %arg3[%c5_27] : memref<12xi32, #tpu.memory_space<smem>>
    %c0_i32_28 = arith.constant 0 : i32
    %67 = arith.cmpi eq, %66, %c0_i32_28 : i32
    %68 = arith.select %67, %2, %5 : vector<16x128xf32>
    %69 = vector.broadcast %65 : f32 to vector<16x128xf32>
    %70 = arith.cmpf olt, %68, %69 : vector<16x128xf32>
    %c5_29 = arith.constant 5 : index
    %71 = memref.load %arg5[%c5_29] : memref<12xi32, #tpu.memory_space<smem>>
    %c5_30 = arith.constant 5 : index
    %72 = memref.load %arg6[%c5_30] : memref<12xi32, #tpu.memory_space<smem>>
    %73 = vector.broadcast %71 : i32 to vector<16x128xi32>
    %74 = vector.broadcast %72 : i32 to vector<16x128xi32>
    %75 = arith.select %70, %73, %74 : vector<16x128xi1>, vector<16x128xi32>
    %c5_31 = arith.constant 5 : index
    %76 = memref.load %arg4[%c5_31] : memref<12xi32, #tpu.memory_space<smem>>
    %c6 = arith.constant 6 : index
    %77 = memref.load %arg2[%c6] : memref<12xf32, #tpu.memory_space<smem>>
    %c6_32 = arith.constant 6 : index
    %78 = memref.load %arg3[%c6_32] : memref<12xi32, #tpu.memory_space<smem>>
    %c0_i32_33 = arith.constant 0 : i32
    %79 = arith.cmpi eq, %78, %c0_i32_33 : i32
    %80 = arith.select %79, %2, %5 : vector<16x128xf32>
    %81 = vector.broadcast %77 : f32 to vector<16x128xf32>
    %82 = arith.cmpf olt, %80, %81 : vector<16x128xf32>
    %c6_34 = arith.constant 6 : index
    %83 = memref.load %arg5[%c6_34] : memref<12xi32, #tpu.memory_space<smem>>
    %c6_35 = arith.constant 6 : index
    %84 = memref.load %arg6[%c6_35] : memref<12xi32, #tpu.memory_space<smem>>
    %85 = vector.broadcast %83 : i32 to vector<16x128xi32>
    %86 = vector.broadcast %84 : i32 to vector<16x128xi32>
    %87 = arith.select %82, %85, %86 : vector<16x128xi1>, vector<16x128xi32>
    %c6_36 = arith.constant 6 : index
    %88 = memref.load %arg4[%c6_36] : memref<12xi32, #tpu.memory_space<smem>>
    %c7 = arith.constant 7 : index
    %89 = memref.load %arg2[%c7] : memref<12xf32, #tpu.memory_space<smem>>
    %c7_37 = arith.constant 7 : index
    %90 = memref.load %arg3[%c7_37] : memref<12xi32, #tpu.memory_space<smem>>
    %c0_i32_38 = arith.constant 0 : i32
    %91 = arith.cmpi eq, %90, %c0_i32_38 : i32
    %92 = arith.select %91, %2, %5 : vector<16x128xf32>
    %93 = vector.broadcast %89 : f32 to vector<16x128xf32>
    %94 = arith.cmpf olt, %92, %93 : vector<16x128xf32>
    %c7_39 = arith.constant 7 : index
    %95 = memref.load %arg5[%c7_39] : memref<12xi32, #tpu.memory_space<smem>>
    %c7_40 = arith.constant 7 : index
    %96 = memref.load %arg6[%c7_40] : memref<12xi32, #tpu.memory_space<smem>>
    %97 = vector.broadcast %95 : i32 to vector<16x128xi32>
    %98 = vector.broadcast %96 : i32 to vector<16x128xi32>
    %99 = arith.select %94, %97, %98 : vector<16x128xi1>, vector<16x128xi32>
    %c7_41 = arith.constant 7 : index
    %100 = memref.load %arg4[%c7_41] : memref<12xi32, #tpu.memory_space<smem>>
    %c8 = arith.constant 8 : index
    %101 = memref.load %arg2[%c8] : memref<12xf32, #tpu.memory_space<smem>>
    %c8_42 = arith.constant 8 : index
    %102 = memref.load %arg3[%c8_42] : memref<12xi32, #tpu.memory_space<smem>>
    %c0_i32_43 = arith.constant 0 : i32
    %103 = arith.cmpi eq, %102, %c0_i32_43 : i32
    %104 = arith.select %103, %2, %5 : vector<16x128xf32>
    %105 = vector.broadcast %101 : f32 to vector<16x128xf32>
    %106 = arith.cmpf olt, %104, %105 : vector<16x128xf32>
    %c8_44 = arith.constant 8 : index
    %107 = memref.load %arg5[%c8_44] : memref<12xi32, #tpu.memory_space<smem>>
    %c8_45 = arith.constant 8 : index
    %108 = memref.load %arg6[%c8_45] : memref<12xi32, #tpu.memory_space<smem>>
    %109 = vector.broadcast %107 : i32 to vector<16x128xi32>
    %110 = vector.broadcast %108 : i32 to vector<16x128xi32>
    %111 = arith.select %106, %109, %110 : vector<16x128xi1>, vector<16x128xi32>
    %c8_46 = arith.constant 8 : index
    %112 = memref.load %arg4[%c8_46] : memref<12xi32, #tpu.memory_space<smem>>
    %c9 = arith.constant 9 : index
    %113 = memref.load %arg2[%c9] : memref<12xf32, #tpu.memory_space<smem>>
    %c9_47 = arith.constant 9 : index
    %114 = memref.load %arg3[%c9_47] : memref<12xi32, #tpu.memory_space<smem>>
    %c0_i32_48 = arith.constant 0 : i32
    %115 = arith.cmpi eq, %114, %c0_i32_48 : i32
    %116 = arith.select %115, %2, %5 : vector<16x128xf32>
    %117 = vector.broadcast %113 : f32 to vector<16x128xf32>
    %118 = arith.cmpf olt, %116, %117 : vector<16x128xf32>
    %c9_49 = arith.constant 9 : index
    %119 = memref.load %arg5[%c9_49] : memref<12xi32, #tpu.memory_space<smem>>
    %c9_50 = arith.constant 9 : index
    %120 = memref.load %arg6[%c9_50] : memref<12xi32, #tpu.memory_space<smem>>
    %121 = vector.broadcast %119 : i32 to vector<16x128xi32>
    %122 = vector.broadcast %120 : i32 to vector<16x128xi32>
    %123 = arith.select %118, %121, %122 : vector<16x128xi1>, vector<16x128xi32>
    %c9_51 = arith.constant 9 : index
    %124 = memref.load %arg4[%c9_51] : memref<12xi32, #tpu.memory_space<smem>>
    %c10 = arith.constant 10 : index
    %125 = memref.load %arg2[%c10] : memref<12xf32, #tpu.memory_space<smem>>
    %c10_52 = arith.constant 10 : index
    %126 = memref.load %arg3[%c10_52] : memref<12xi32, #tpu.memory_space<smem>>
    %c0_i32_53 = arith.constant 0 : i32
    %127 = arith.cmpi eq, %126, %c0_i32_53 : i32
    %128 = arith.select %127, %2, %5 : vector<16x128xf32>
    %129 = vector.broadcast %125 : f32 to vector<16x128xf32>
    %130 = arith.cmpf olt, %128, %129 : vector<16x128xf32>
    %c10_54 = arith.constant 10 : index
    %131 = memref.load %arg5[%c10_54] : memref<12xi32, #tpu.memory_space<smem>>
    %c10_55 = arith.constant 10 : index
    %132 = memref.load %arg6[%c10_55] : memref<12xi32, #tpu.memory_space<smem>>
    %133 = vector.broadcast %131 : i32 to vector<16x128xi32>
    %134 = vector.broadcast %132 : i32 to vector<16x128xi32>
    %135 = arith.select %130, %133, %134 : vector<16x128xi1>, vector<16x128xi32>
    %c10_56 = arith.constant 10 : index
    %136 = memref.load %arg4[%c10_56] : memref<12xi32, #tpu.memory_space<smem>>
    %c11 = arith.constant 11 : index
    %137 = memref.load %arg2[%c11] : memref<12xf32, #tpu.memory_space<smem>>
    %c11_57 = arith.constant 11 : index
    %138 = memref.load %arg3[%c11_57] : memref<12xi32, #tpu.memory_space<smem>>
    %c0_i32_58 = arith.constant 0 : i32
    %139 = arith.cmpi eq, %138, %c0_i32_58 : i32
    %140 = arith.select %139, %2, %5 : vector<16x128xf32>
    %141 = vector.broadcast %137 : f32 to vector<16x128xf32>
    %142 = arith.cmpf olt, %140, %141 : vector<16x128xf32>
    %c11_59 = arith.constant 11 : index
    %143 = memref.load %arg5[%c11_59] : memref<12xi32, #tpu.memory_space<smem>>
    %c11_60 = arith.constant 11 : index
    %144 = memref.load %arg6[%c11_60] : memref<12xi32, #tpu.memory_space<smem>>
    %145 = vector.broadcast %143 : i32 to vector<16x128xi32>
    %146 = vector.broadcast %144 : i32 to vector<16x128xi32>
    %147 = arith.select %142, %145, %146 : vector<16x128xi1>, vector<16x128xi32>
    %c11_61 = arith.constant 11 : index
    %148 = memref.load %arg4[%c11_61] : memref<12xi32, #tpu.memory_space<smem>>
    %149 = vector.broadcast %28 : i32 to vector<16x128xi32>
    %150 = arith.cmpi eq, %16, %149 : vector<16x128xi32>
    %151 = arith.select %150, %27, %16 : vector<16x128xi1>, vector<16x128xi32>
    %152 = vector.broadcast %40 : i32 to vector<16x128xi32>
    %153 = arith.cmpi eq, %16, %152 : vector<16x128xi32>
    %154 = arith.select %153, %39, %151 : vector<16x128xi1>, vector<16x128xi32>
    %155 = vector.broadcast %52 : i32 to vector<16x128xi32>
    %156 = arith.cmpi eq, %16, %155 : vector<16x128xi32>
    %157 = arith.select %156, %51, %154 : vector<16x128xi1>, vector<16x128xi32>
    %158 = vector.broadcast %64 : i32 to vector<16x128xi32>
    %159 = arith.cmpi eq, %16, %158 : vector<16x128xi32>
    %160 = arith.select %159, %63, %157 : vector<16x128xi1>, vector<16x128xi32>
    %161 = vector.broadcast %76 : i32 to vector<16x128xi32>
    %162 = arith.cmpi eq, %16, %161 : vector<16x128xi32>
    %163 = arith.select %162, %75, %160 : vector<16x128xi1>, vector<16x128xi32>
    %164 = vector.broadcast %88 : i32 to vector<16x128xi32>
    %165 = arith.cmpi eq, %16, %164 : vector<16x128xi32>
    %166 = arith.select %165, %87, %163 : vector<16x128xi1>, vector<16x128xi32>
    %167 = vector.broadcast %100 : i32 to vector<16x128xi32>
    %168 = arith.cmpi eq, %16, %167 : vector<16x128xi32>
    %169 = arith.select %168, %99, %166 : vector<16x128xi1>, vector<16x128xi32>
    %170 = vector.broadcast %112 : i32 to vector<16x128xi32>
    %171 = arith.cmpi eq, %16, %170 : vector<16x128xi32>
    %172 = arith.select %171, %111, %169 : vector<16x128xi1>, vector<16x128xi32>
    %173 = vector.broadcast %124 : i32 to vector<16x128xi32>
    %174 = arith.cmpi eq, %16, %173 : vector<16x128xi32>
    %175 = arith.select %174, %123, %172 : vector<16x128xi1>, vector<16x128xi32>
    %176 = vector.broadcast %136 : i32 to vector<16x128xi32>
    %177 = arith.cmpi eq, %16, %176 : vector<16x128xi32>
    %178 = arith.select %177, %135, %175 : vector<16x128xi1>, vector<16x128xi32>
    %179 = vector.broadcast %148 : i32 to vector<16x128xi32>
    %180 = arith.cmpi eq, %16, %179 : vector<16x128xi32>
    %181 = arith.select %180, %147, %178 : vector<16x128xi1>, vector<16x128xi32>
    %182 = vector.broadcast %28 : i32 to vector<16x128xi32>
    %183 = arith.cmpi eq, %181, %182 : vector<16x128xi32>
    %184 = arith.select %183, %27, %16 : vector<16x128xi1>, vector<16x128xi32>
    %185 = vector.broadcast %40 : i32 to vector<16x128xi32>
    %186 = arith.cmpi eq, %181, %185 : vector<16x128xi32>
    %187 = arith.select %186, %39, %184 : vector<16x128xi1>, vector<16x128xi32>
    %188 = vector.broadcast %52 : i32 to vector<16x128xi32>
    %189 = arith.cmpi eq, %181, %188 : vector<16x128xi32>
    %190 = arith.select %189, %51, %187 : vector<16x128xi1>, vector<16x128xi32>
    %191 = vector.broadcast %64 : i32 to vector<16x128xi32>
    %192 = arith.cmpi eq, %181, %191 : vector<16x128xi32>
    %193 = arith.select %192, %63, %190 : vector<16x128xi1>, vector<16x128xi32>
    %194 = vector.broadcast %76 : i32 to vector<16x128xi32>
    %195 = arith.cmpi eq, %181, %194 : vector<16x128xi32>
    %196 = arith.select %195, %75, %193 : vector<16x128xi1>, vector<16x128xi32>
    %197 = vector.broadcast %88 : i32 to vector<16x128xi32>
    %198 = arith.cmpi eq, %181, %197 : vector<16x128xi32>
    %199 = arith.select %198, %87, %196 : vector<16x128xi1>, vector<16x128xi32>
    %200 = vector.broadcast %100 : i32 to vector<16x128xi32>
    %201 = arith.cmpi eq, %181, %200 : vector<16x128xi32>
    %202 = arith.select %201, %99, %199 : vector<16x128xi1>, vector<16x128xi32>
    %203 = vector.broadcast %112 : i32 to vector<16x128xi32>
    %204 = arith.cmpi eq, %181, %203 : vector<16x128xi32>
    %205 = arith.select %204, %111, %202 : vector<16x128xi1>, vector<16x128xi32>
    %206 = vector.broadcast %124 : i32 to vector<16x128xi32>
    %207 = arith.cmpi eq, %181, %206 : vector<16x128xi32>
    %208 = arith.select %207, %123, %205 : vector<16x128xi1>, vector<16x128xi32>
    %209 = vector.broadcast %136 : i32 to vector<16x128xi32>
    %210 = arith.cmpi eq, %181, %209 : vector<16x128xi32>
    %211 = arith.select %210, %135, %208 : vector<16x128xi1>, vector<16x128xi32>
    %212 = vector.broadcast %148 : i32 to vector<16x128xi32>
    %213 = arith.cmpi eq, %181, %212 : vector<16x128xi32>
    %214 = arith.select %213, %147, %211 : vector<16x128xi1>, vector<16x128xi32>
    %215 = vector.broadcast %28 : i32 to vector<16x128xi32>
    %216 = arith.cmpi eq, %214, %215 : vector<16x128xi32>
    %217 = arith.select %216, %27, %16 : vector<16x128xi1>, vector<16x128xi32>
    %218 = vector.broadcast %40 : i32 to vector<16x128xi32>
    %219 = arith.cmpi eq, %214, %218 : vector<16x128xi32>
    %220 = arith.select %219, %39, %217 : vector<16x128xi1>, vector<16x128xi32>
    %221 = vector.broadcast %52 : i32 to vector<16x128xi32>
    %222 = arith.cmpi eq, %214, %221 : vector<16x128xi32>
    %223 = arith.select %222, %51, %220 : vector<16x128xi1>, vector<16x128xi32>
    %224 = vector.broadcast %64 : i32 to vector<16x128xi32>
    %225 = arith.cmpi eq, %214, %224 : vector<16x128xi32>
    %226 = arith.select %225, %63, %223 : vector<16x128xi1>, vector<16x128xi32>
    %227 = vector.broadcast %76 : i32 to vector<16x128xi32>
    %228 = arith.cmpi eq, %214, %227 : vector<16x128xi32>
    %229 = arith.select %228, %75, %226 : vector<16x128xi1>, vector<16x128xi32>
    %230 = vector.broadcast %88 : i32 to vector<16x128xi32>
    %231 = arith.cmpi eq, %214, %230 : vector<16x128xi32>
    %232 = arith.select %231, %87, %229 : vector<16x128xi1>, vector<16x128xi32>
    %233 = vector.broadcast %100 : i32 to vector<16x128xi32>
    %234 = arith.cmpi eq, %214, %233 : vector<16x128xi32>
    %235 = arith.select %234, %99, %232 : vector<16x128xi1>, vector<16x128xi32>
    %236 = vector.broadcast %112 : i32 to vector<16x128xi32>
    %237 = arith.cmpi eq, %214, %236 : vector<16x128xi32>
    %238 = arith.select %237, %111, %235 : vector<16x128xi1>, vector<16x128xi32>
    %239 = vector.broadcast %124 : i32 to vector<16x128xi32>
    %240 = arith.cmpi eq, %214, %239 : vector<16x128xi32>
    %241 = arith.select %240, %123, %238 : vector<16x128xi1>, vector<16x128xi32>
    %242 = vector.broadcast %136 : i32 to vector<16x128xi32>
    %243 = arith.cmpi eq, %214, %242 : vector<16x128xi32>
    %244 = arith.select %243, %135, %241 : vector<16x128xi1>, vector<16x128xi32>
    %245 = vector.broadcast %148 : i32 to vector<16x128xi32>
    %246 = arith.cmpi eq, %214, %245 : vector<16x128xi32>
    %247 = arith.select %246, %147, %244 : vector<16x128xi1>, vector<16x128xi32>
    %248 = vector.broadcast %28 : i32 to vector<16x128xi32>
    %249 = arith.cmpi eq, %247, %248 : vector<16x128xi32>
    %250 = arith.select %249, %27, %16 : vector<16x128xi1>, vector<16x128xi32>
    %251 = vector.broadcast %40 : i32 to vector<16x128xi32>
    %252 = arith.cmpi eq, %247, %251 : vector<16x128xi32>
    %253 = arith.select %252, %39, %250 : vector<16x128xi1>, vector<16x128xi32>
    %254 = vector.broadcast %52 : i32 to vector<16x128xi32>
    %255 = arith.cmpi eq, %247, %254 : vector<16x128xi32>
    %256 = arith.select %255, %51, %253 : vector<16x128xi1>, vector<16x128xi32>
    %257 = vector.broadcast %64 : i32 to vector<16x128xi32>
    %258 = arith.cmpi eq, %247, %257 : vector<16x128xi32>
    %259 = arith.select %258, %63, %256 : vector<16x128xi1>, vector<16x128xi32>
    %260 = vector.broadcast %76 : i32 to vector<16x128xi32>
    %261 = arith.cmpi eq, %247, %260 : vector<16x128xi32>
    %262 = arith.select %261, %75, %259 : vector<16x128xi1>, vector<16x128xi32>
    %263 = vector.broadcast %88 : i32 to vector<16x128xi32>
    %264 = arith.cmpi eq, %247, %263 : vector<16x128xi32>
    %265 = arith.select %264, %87, %262 : vector<16x128xi1>, vector<16x128xi32>
    %266 = vector.broadcast %100 : i32 to vector<16x128xi32>
    %267 = arith.cmpi eq, %247, %266 : vector<16x128xi32>
    %268 = arith.select %267, %99, %265 : vector<16x128xi1>, vector<16x128xi32>
    %269 = vector.broadcast %112 : i32 to vector<16x128xi32>
    %270 = arith.cmpi eq, %247, %269 : vector<16x128xi32>
    %271 = arith.select %270, %111, %268 : vector<16x128xi1>, vector<16x128xi32>
    %272 = vector.broadcast %124 : i32 to vector<16x128xi32>
    %273 = arith.cmpi eq, %247, %272 : vector<16x128xi32>
    %274 = arith.select %273, %123, %271 : vector<16x128xi1>, vector<16x128xi32>
    %275 = vector.broadcast %136 : i32 to vector<16x128xi32>
    %276 = arith.cmpi eq, %247, %275 : vector<16x128xi32>
    %277 = arith.select %276, %135, %274 : vector<16x128xi1>, vector<16x128xi32>
    %278 = vector.broadcast %148 : i32 to vector<16x128xi32>
    %279 = arith.cmpi eq, %247, %278 : vector<16x128xi32>
    %280 = arith.select %279, %147, %277 : vector<16x128xi1>, vector<16x128xi32>
    %281 = vector.broadcast %28 : i32 to vector<16x128xi32>
    %282 = arith.cmpi eq, %280, %281 : vector<16x128xi32>
    %283 = arith.select %282, %27, %16 : vector<16x128xi1>, vector<16x128xi32>
    %284 = vector.broadcast %40 : i32 to vector<16x128xi32>
    %285 = arith.cmpi eq, %280, %284 : vector<16x128xi32>
    %286 = arith.select %285, %39, %283 : vector<16x128xi1>, vector<16x128xi32>
    %287 = vector.broadcast %52 : i32 to vector<16x128xi32>
    %288 = arith.cmpi eq, %280, %287 : vector<16x128xi32>
    %289 = arith.select %288, %51, %286 : vector<16x128xi1>, vector<16x128xi32>
    %290 = vector.broadcast %64 : i32 to vector<16x128xi32>
    %291 = arith.cmpi eq, %280, %290 : vector<16x128xi32>
    %292 = arith.select %291, %63, %289 : vector<16x128xi1>, vector<16x128xi32>
    %293 = vector.broadcast %76 : i32 to vector<16x128xi32>
    %294 = arith.cmpi eq, %280, %293 : vector<16x128xi32>
    %295 = arith.select %294, %75, %292 : vector<16x128xi1>, vector<16x128xi32>
    %296 = vector.broadcast %88 : i32 to vector<16x128xi32>
    %297 = arith.cmpi eq, %280, %296 : vector<16x128xi32>
    %298 = arith.select %297, %87, %295 : vector<16x128xi1>, vector<16x128xi32>
    %299 = vector.broadcast %100 : i32 to vector<16x128xi32>
    %300 = arith.cmpi eq, %280, %299 : vector<16x128xi32>
    %301 = arith.select %300, %99, %298 : vector<16x128xi1>, vector<16x128xi32>
    %302 = vector.broadcast %112 : i32 to vector<16x128xi32>
    %303 = arith.cmpi eq, %280, %302 : vector<16x128xi32>
    %304 = arith.select %303, %111, %301 : vector<16x128xi1>, vector<16x128xi32>
    %305 = vector.broadcast %124 : i32 to vector<16x128xi32>
    %306 = arith.cmpi eq, %280, %305 : vector<16x128xi32>
    %307 = arith.select %306, %123, %304 : vector<16x128xi1>, vector<16x128xi32>
    %308 = vector.broadcast %136 : i32 to vector<16x128xi32>
    %309 = arith.cmpi eq, %280, %308 : vector<16x128xi32>
    %310 = arith.select %309, %135, %307 : vector<16x128xi1>, vector<16x128xi32>
    %311 = vector.broadcast %148 : i32 to vector<16x128xi32>
    %312 = arith.cmpi eq, %280, %311 : vector<16x128xi32>
    %313 = arith.select %312, %147, %310 : vector<16x128xi1>, vector<16x128xi32>
    %c16_i32 = arith.constant 16 : i32
    %314 = vector.broadcast %c16_i32 : i32 to vector<16x128xi32>
    %315 = arith.shrsi %313, %314 : vector<16x128xi32>
    %c0_62 = arith.constant 0 : index
    %c0_63 = arith.constant 0 : index
    %316 = vector.load %arg9[%c0_62, %c0_63] : memref<16x128xi32, #tpu.memory_space<vmem>>, vector<16x128xi32>
    tpu.vector_store %arg9[%c0_62, %c0_63], %315 {strides = array<i32>} : memref<16x128xi32, #tpu.memory_space<vmem>>, vector<16x128xi32>,
    return
  }
  func.func @transform_0(%arg0: i32, %arg1: i32) -> i32 {
    %c0_i32 = arith.constant 0 : i32
    %c0_i32_0 = arith.constant 0 : i32
    return %c0_i32 : i32
  }
  func.func @transform_1(%arg0: i32, %arg1: i32) -> i32 {
    %c0_i32 = arith.constant 0 : i32
    %c0_i32_0 = arith.constant 0 : i32
    return %c0_i32 : i32
  }
  func.func @transform_2(%arg0: i32, %arg1: i32) -> i32 {
    %c0_i32 = arith.constant 0 : i32
    %c0_i32_0 = arith.constant 0 : i32
    return %c0_i32 : i32
  }
  func.func @transform_3(%arg0: i32, %arg1: i32) -> i32 {
    %c0_i32 = arith.constant 0 : i32
    %c0_i32_0 = arith.constant 0 : i32
    return %c0_i32 : i32
  }
  func.func @transform_4(%arg0: i32, %arg1: i32) -> i32 {
    %c0_i32 = arith.constant 0 : i32
    %c0_i32_0 = arith.constant 0 : i32
    return %c0_i32 : i32
  }
  func.func @transform_5(%arg0: i32, %arg1: i32) -> (i32, i32) {
    %c0_i32 = arith.constant 0 : i32
    %c0_i32_0 = arith.constant 0 : i32
    return %arg0, %c0_i32 : i32, i32
  }
  func.func @transform_6(%arg0: i32, %arg1: i32) -> (i32, i32) {
    %c0_i32 = arith.constant 0 : i32
    %c0_i32_0 = arith.constant 0 : i32
    return %c0_i32, %arg1 : i32, i32
  }
  func.func @transform_7(%arg0: i32, %arg1: i32) -> (i32, i32) {
    %c0_i32 = arith.constant 0 : i32
    return %arg0, %arg1 : i32, i32
  }
}

</mosaic_0001>

<llo_original>
// kernel: tpu_custom_call.1
$region0: #{tpu_custom_call.1}
  #allocation0 [shape = 'u32[]', space=smem, size = 0x4, offset = 0x4, fixed_abs, tag = 'smem constant byte address 0x4 - core index']
  #allocation1 [shape = 'u32[144,128]{1,0:T(1,128)}', space=vmem, size = 0x12000, scoped, tag = 'internal scratch']
  %s0 = inlined_call_operand.vmem [shape: f32[12], index: 0, kind: input, shape index: {}]
  %s1 = inlined_call_operand.vmem [shape: s32[12], index: 1, kind: input, shape index: {}]
  %s2 = inlined_call_operand.vmem [shape: s32[12], index: 2, kind: input, shape index: {}]
  %s3 = inlined_call_operand.vmem [shape: s32[12], index: 3, kind: input, shape index: {}]
  %s4 = inlined_call_operand.vmem [shape: s32[12], index: 4, kind: input, shape index: {}]
  %s5 = inlined_call_operand.vmem [shape: f32[16,1], index: 5, kind: input, shape index: {}]
  %s6 = inlined_call_operand.vmem [shape: f32[1,128], index: 6, kind: input, shape index: {}]
  %s7 = inlined_call_operand.hbm [shape: s32[16,128], index: 7, kind: output, shape index: {}]
  %s8 = sld [smem:[#allocation0]]
  $region58: #{tpu_custom_call.1} parent=0
    _
  %s10 = ssub.s32 1, %s8
  %s11 = scalar_select 0, %s10, %s8
  $region1: #{tpu_custom_call.1} parent=0
    #allocation2 [shape = 'u8[512]{0}', space=smem, size = 0x200, scoped, tag = 'input window, operand 0, single buffered']
    #allocation3 [shape = 's32[1]{0}', space=sflag, size = 0x4, scoped, tag = 'scoped memory for tpu_custom_call.1']
    #allocation4 [shape = 's32[1]{0}', space=sflag, size = 0x4, scoped, tag = 'scoped memory for tpu_custom_call.1']
    #allocation5 [shape = 'u8[512]{0}', space=smem, size = 0x200, scoped, tag = 'input window, operand 1, single buffered']
    #allocation6 [shape = 's32[1]{0}', space=sflag, size = 0x4, scoped, tag = 'scoped memory for tpu_custom_call.1']
    #allocation7 [shape = 'u8[512]{0}', space=smem, size = 0x200, scoped, tag = 'input window, operand 2, single buffered']
    #allocation8 [shape = 'u8[512]{0}', space=smem, size = 0x200, scoped, tag = 'input window, operand 3, single buffered']
    #allocation9 [shape = 's32[1]{0}', space=sflag, size = 0x4, scoped, tag = 'scoped memory for tpu_custom_call.1']
    #allocation10 [shape = 'u8[512]{0}', space=smem, size = 0x200, scoped, tag = 'input window, operand 4, single buffered']
    #allocation11 [shape = 'u8[8192]{0}', space=vmem, size = 0x2000, scoped, tag = 'output window, operand 0, single buffered']
    %12 = vsyncpa [#allocation4], 0
    %13 = vsyncpa [#allocation6], 0
    %14 = vsyncpa [#allocation9], 0
    %15 = vsyncpa [#allocation3], 0
    // Predicated region
    $region2: #{tpu_custom_call.1} parent=1 // pred_check
      _
    $region3: #{tpu_custom_call.1} parent=1 // pred_check_branch
      %17 = sbr.rel (0) target = $region5
    $region4: #{tpu_custom_call.1} parent=1 // pred_region
      %s19 = ssub.s32 16, 16
      %20 = vsyncadd [#allocation4], %s19
      %s22 = sshll.u32 %s0, 4
      %s23 = int_to_ptr.vmem [resolvable:$true] %s22
      %25 = dma.vmem_to_smem %s23, 16, [#allocation2], [#allocation4]
    $region5: #{tpu_custom_call.1} parent=1 // pred_fallthru
      _
    // Predicated region
    $region6: #{tpu_custom_call.1} parent=1 // pred_check
      _
    $region7: #{tpu_custom_call.1} parent=1 // pred_check_branch
      %27 = sbr.rel (0) target = $region9
    $region8: #{tpu_custom_call.1} parent=1 // pred_region
      %s29 = ssub.s32 16, 16
      %30 = vsyncadd [#allocation6], %s29
      %s32 = sshll.u32 %s1, 4
      %s33 = int_to_ptr.vmem [resolvable:$true] %s32
      %35 = dma.vmem_to_smem %s33, 16, [#allocation5], [#allocation6]
    $region9: #{tpu_custom_call.1} parent=1 // pred_fallthru
      _
    // Predicated region
    $region10: #{tpu_custom_call.1} parent=1 // pred_check
      _
    $region11: #{tpu_custom_call.1} parent=1 // pred_check_branch
      %37 = sbr.rel (0) target = $region13
    $region12: #{tpu_custom_call.1} parent=1 // pred_region
      %s39 = ssub.s32 16, 16
      %40 = vsyncadd [#allocation6], %s39
      %s42 = sshll.u32 %s2, 4
      %s43 = int_to_ptr.vmem [resolvable:$true] %s42
      %45 = dma.vmem_to_smem %s43, 16, [#allocation7], [#allocation6]
    $region13: #{tpu_custom_call.1} parent=1 // pred_fallthru
      _
    // Predicated region
    $region14: #{tpu_custom_call.1} parent=1 // pred_check
      _
    $region15: #{tpu_custom_call.1} parent=1 // pred_check_branch
      %47 = sbr.rel (0) target = $region17
    $region16: #{tpu_custom_call.1} parent=1 // pred_region
      %s49 = ssub.s32 16, 16
      %50 = vsyncadd [#allocation9], %s49
      %s52 = sshll.u32 %s3, 4
      %s53 = int_to_ptr.vmem [resolvable:$true] %s52
      %55 = dma.vmem_to_smem %s53, 16, [#allocation8], [#allocation9]
    $region17: #{tpu_custom_call.1} parent=1 // pred_fallthru
      _
    // Predicated region
    $region18: #{tpu_custom_call.1} parent=1 // pred_check
      _
    $region19: #{tpu_custom_call.1} parent=1 // pred_check_branch
      %57 = sbr.rel (0) target = $region21
    $region20: #{tpu_custom_call.1} parent=1 // pred_region
      %s59 = ssub.s32 16, 16
      %60 = vsyncadd [#allocation9], %s59
      %s62 = sshll.u32 %s4, 4
      %s63 = int_to_ptr.vmem [resolvable:$true] %s62
      %65 = dma.vmem_to_smem %s63, 16, [#allocation10], [#allocation9]
    $region21: #{tpu_custom_call.1} parent=1 // pred_fallthru
      _
    // Predicated region
    $region22: #{tpu_custom_call.1} parent=1 // pred_check
      _
    $region23: #{tpu_custom_call.1} parent=1 // pred_check_branch
      %67 = sbr.rel (0) target = $region25
    $region24: #{tpu_custom_call.1} parent=1 // pred_region
      _
    $region25: #{tpu_custom_call.1} parent=1 // pred_fallthru
      _
    // Predicated region
    $region26: #{tpu_custom_call.1} parent=1 // pred_check
      _
    $region27: #{tpu_custom_call.1} parent=1 // pred_check_branch
      %69 = sbr.rel (0) target = $region29
    $region28: #{tpu_custom_call.1} parent=1 // pred_region
      _
    $region29: #{tpu_custom_call.1} parent=1 // pred_fallthru
      _
    // Predicated region
    $region30: #{tpu_custom_call.1} parent=1 // pred_check
      _
    $region31: #{tpu_custom_call.1} parent=1 // pred_check_branch
      %71 = sbr.rel (0) target = $region33
    $region32: #{tpu_custom_call.1} parent=1 // pred_region
      %72 = dma.done [#allocation4], 16
    $region33: #{tpu_custom_call.1} parent=1 // pred_fallthru
      _
    // Predicated region
    $region34: #{tpu_custom_call.1} parent=1 // pred_check
      _
    $region35: #{tpu_custom_call.1} parent=1 // pred_check_branch
      %74 = sbr.rel (0) target = $region37
    $region36: #{tpu_custom_call.1} parent=1 // pred_region
      %75 = dma.done [#allocation6], 16
    $region37: #{tpu_custom_call.1} parent=1 // pred_fallthru
      _
    // Predicated region
    $region38: #{tpu_custom_call.1} parent=1 // pred_check
      _
    $region39: #{tpu_custom_call.1} parent=1 // pred_check_branch
      %77 = sbr.rel (0) target = $region41
    $region40: #{tpu_custom_call.1} parent=1 // pred_region
      %78 = dma.done [#allocation6], 16
    $region41: #{tpu_custom_call.1} parent=1 // pred_fallthru
      _
    // Predicated region
    $region42: #{tpu_custom_call.1} parent=1 // pred_check
      _
    $region43: #{tpu_custom_call.1} parent=1 // pred_check_branch
      %80 = sbr.rel (0) target = $region45
    $region44: #{tpu_custom_call.1} parent=1 // pred_region
      %81 = dma.done [#allocation9], 16
    $region45: #{tpu_custom_call.1} parent=1 // pred_fallthru
      _
    // Predicated region
    $region46: #{tpu_custom_call.1} parent=1 // pred_check
      _
    $region47: #{tpu_custom_call.1} parent=1 // pred_check_branch
      %83 = sbr.rel (0) target = $region49
    $region48: #{tpu_custom_call.1} parent=1 // pred_region
      %84 = dma.done [#allocation9], 16
    $region49: #{tpu_custom_call.1} parent=1 // pred_fallthru
      _
    %85 = sfence
    %v86 = vld [vmem:[%s5] sm:$0xff]
    %v87 = vld [vmem:[%s5 + $0x8] sm:$0xff]
    %89 = vset.pattern.permute.xlu0 0
    %90 = vperm.xlu0 %89, %v86
    %v91 = vpop.permute.xlu0 %90
    %94 = vset.pattern.permute.xlu0 0
    %95 = vperm.xlu0 %94, %v87
    %v96 = vpop.permute.xlu0 %95
    %v98 = vld [vmem:[%s6] sm:$0x1]
    %v100 = vlaneseq
    %v101 = vshrl.u32 %v100, 7
    %v102 = vsub.s32 0, %v101
    %v103 = vrot.slane %v98, %v102
    %s105 = sld [smem:[#allocation2]]
    %s106 = sld [smem:[#allocation5]]
    %p107 = scmp.eq.s32.totalorder %s106, 0
    %s108 = scalar_select %p107, 1, 0
    %v109 = vstv %s108
    %vm110 = vcmp.eq.s32.totalorder %v109, 1
    %v111 = vsel %vm110, %v91, %v103
    %v112 = vsel %vm110, %v96, %v103
    %v113 = vstv %s105
    %vm114 = vcmp.lt.f32.partialorder %v111, %v113
    %vm115 = vcmp.lt.f32.partialorder %v112, %v113
    %s116 = sld [smem:[#allocation8]]
    %s117 = sld [smem:[#allocation10]]
    %v118 = vstv %s116
    %v119 = vstv %s117
    %v120 = vsel %vm114, %v118, %v119
    %v121 = vsel %vm115, %v118, %v119
    %s122 = sld [smem:[#allocation2 + $0x1]]
    %s123 = sld [smem:[#allocation5 + $0x1]]
    %p124 = scmp.eq.s32.totalorder %s123, 0
    %s125 = scalar_select %p124, 1, 0
    %v126 = vstv %s125
    %vm127 = vcmp.eq.s32.totalorder %v126, 1
    %v128 = vsel %vm127, %v91, %v103
    %v129 = vsel %vm127, %v96, %v103
    %v130 = vstv %s122
    %vm131 = vcmp.lt.f32.partialorder %v128, %v130
    %vm132 = vcmp.lt.f32.partialorder %v129, %v130
    %s133 = sld [smem:[#allocation8 + $0x1]]
    %s134 = sld [smem:[#allocation10 + $0x1]]
    %v135 = vstv %s133
    %v136 = vstv %s134
    %v137 = vsel %vm131, %v135, %v136
    %v138 = vsel %vm132, %v135, %v136
    %s139 = sld [smem:[#allocation7 + $0x1]]
    %s140 = sld [smem:[#allocation2 + $0x2]]
    %s141 = sld [smem:[#allocation5 + $0x2]]
    %p142 = scmp.eq.s32.totalorder %s141, 0
    %s143 = scalar_select %p142, 1, 0
    %v144 = vstv %s143
    %vm145 = vcmp.eq.s32.totalorder %v144, 1
    %v146 = vsel %vm145, %v91, %v103
    %v147 = vsel %vm145, %v96, %v103
    %v148 = vstv %s140
    %vm149 = vcmp.lt.f32.partialorder %v146, %v148
    %vm150 = vcmp.lt.f32.partialorder %v147, %v148
    %s151 = sld [smem:[#allocation8 + $0x2]]
    %s152 = sld [smem:[#allocation10 + $0x2]]
    %v153 = vstv %s151
    %v154 = vstv %s152
    %v155 = vsel %vm149, %v153, %v154
    %v156 = vsel %vm150, %v153, %v154
    %s157 = sld [smem:[#allocation7 + $0x2]]
    %s158 = sld [smem:[#allocation2 + $0x3]]
    %s159 = sld [smem:[#allocation5 + $0x3]]
    %p160 = scmp.eq.s32.totalorder %s159, 0
    %s161 = scalar_select %p160, 1, 0
    %v162 = vstv %s161
    %vm163 = vcmp.eq.s32.totalorder %v162, 1
    %v164 = vsel %vm163, %v91, %v103
    %v165 = vsel %vm163, %v96, %v103
    %v166 = vstv %s158
    %vm167 = vcmp.lt.f32.partialorder %v164, %v166
    %vm168 = vcmp.lt.f32.partialorder %v165, %v166
    %s169 = sld [smem:[#allocation8 + $0x3]]
    %s170 = sld [smem:[#allocation10 + $0x3]]
    %v171 = vstv %s169
    %v172 = vstv %s170
    %v173 = vsel %vm167, %v171, %v172
    %v174 = vsel %vm168, %v171, %v172
    %s175 = sld [smem:[#allocation7 + $0x3]]
    %s176 = sld [smem:[#allocation2 + $0x4]]
    %s177 = sld [smem:[#allocation5 + $0x4]]
    %p178 = scmp.eq.s32.totalorder %s177, 0
    %s179 = scalar_select %p178, 1, 0
    %v180 = vstv %s179
    %vm181 = vcmp.eq.s32.totalorder %v180, 1
    %v182 = vsel %vm181, %v91, %v103
    %v183 = vsel %vm181, %v96, %v103
    %v184 = vstv %s176
    %vm185 = vcmp.lt.f32.partialorder %v182, %v184
    %vm186 = vcmp.lt.f32.partialorder %v183, %v184
    %s187 = sld [smem:[#allocation8 + $0x4]]
    %s188 = sld [smem:[#allocation10 + $0x4]]
    %v189 = vstv %s187
    %v190 = vstv %s188
    %v191 = vsel %vm185, %v189, %v190
    %v192 = vsel %vm186, %v189, %v190
    %s193 = sld [smem:[#allocation7 + $0x4]]
    %s194 = sld [smem:[#allocation2 + $0x5]]
    %s195 = sld [smem:[#allocation5 + $0x5]]
    %p196 = scmp.eq.s32.totalorder %s195, 0
    %s197 = scalar_select %p196, 1, 0
    %v198 = vstv %s197
    %vm199 = vcmp.eq.s32.totalorder %v198, 1
    %v200 = vsel %vm199, %v91, %v103
    %v201 = vsel %vm199, %v96, %v103
    %v202 = vstv %s194
    %vm203 = vcmp.lt.f32.partialorder %v200, %v202
    %vm204 = vcmp.lt.f32.partialorder %v201, %v202
    %s205 = sld [smem:[#allocation8 + $0x5]]
    %s206 = sld [smem:[#allocation10 + $0x5]]
    %v207 = vstv %s205
    %v208 = vstv %s206
    %v209 = vsel %vm203, %v207, %v208
    %v210 = vsel %vm204, %v207, %v208
    %s211 = sld [smem:[#allocation7 + $0x5]]
    %s212 = sld [smem:[#allocation2 + $0x6]]
    %s213 = sld [smem:[#allocation5 + $0x6]]
    %p214 = scmp.eq.s32.totalorder %s213, 0
    %s215 = scalar_select %p214, 1, 0
    %v216 = vstv %s215
    %vm217 = vcmp.eq.s32.totalorder %v216, 1
    %v218 = vsel %vm217, %v91, %v103
    %v219 = vsel %vm217, %v96, %v103
    %v220 = vstv %s212
    %vm221 = vcmp.lt.f32.partialorder %v218, %v220
    %vm222 = vcmp.lt.f32.partialorder %v219, %v220
    %s223 = sld [smem:[#allocation8 + $0x6]]
    %s224 = sld [smem:[#allocation10 + $0x6]]
    %v225 = vstv %s223
    %v226 = vstv %s224
    %v227 = vsel %vm221, %v225, %v226
    %v228 = vsel %vm222, %v225, %v226
    %s229 = sld [smem:[#allocation7 + $0x6]]
    %s230 = sld [smem:[#allocation2 + $0x7]]
    %s231 = sld [smem:[#allocation5 + $0x7]]
    %p232 = scmp.eq.s32.totalorder %s231, 0
    %s233 = scalar_select %p232, 1, 0
    %v234 = vstv %s233
    %vm235 = vcmp.eq.s32.totalorder %v234, 1
    %v236 = vsel %vm235, %v91, %v103
    %v237 = vsel %vm235, %v96, %v103
    %v238 = vstv %s230
    %vm239 = vcmp.lt.f32.partialorder %v236, %v238
    %vm240 = vcmp.lt.f32.partialorder %v237, %v238
    %s241 = sld [smem:[#allocation8 + $0x7]]
    %s242 = sld [smem:[#allocation10 + $0x7]]
    %v243 = vstv %s241
    %v244 = vstv %s242
    %v245 = vsel %vm239, %v243, %v244
    %v246 = vsel %vm240, %v243, %v244
    %s247 = sld [smem:[#allocation7 + $0x7]]
    %s248 = sld [smem:[#allocation2 + $0x8]]
    %s249 = sld [smem:[#allocation5 + $0x8]]
    %p250 = scmp.eq.s32.totalorder %s249, 0
    %s251 = scalar_select %p250, 1, 0
    %v252 = vstv %s251
    %vm253 = vcmp.eq.s32.totalorder %v252, 1
    %v254 = vsel %vm253, %v91, %v103
    %v255 = vsel %vm253, %v96, %v103
    %v256 = vstv %s248
    %vm257 = vcmp.lt.f32.partialorder %v254, %v256
    %vm258 = vcmp.lt.f32.partialorder %v255, %v256
    %s259 = sld [smem:[#allocation8 + $0x8]]
    %s260 = sld [smem:[#allocation10 + $0x8]]
    %v261 = vstv %s259
    %v262 = vstv %s260
    %v263 = vsel %vm257, %v261, %v262
    %v264 = vsel %vm258, %v261, %v262
    %s265 = sld [smem:[#allocation7 + $0x8]]
    %s266 = sld [smem:[#allocation2 + $0x9]]
    %s267 = sld [smem:[#allocation5 + $0x9]]
    %p268 = scmp.eq.s32.totalorder %s267, 0
    %s269 = scalar_select %p268, 1, 0
    %v270 = vstv %s269
    %vm271 = vcmp.eq.s32.totalorder %v270, 1
    %v272 = vsel %vm271, %v91, %v103
    %v273 = vsel %vm271, %v96, %v103
    %v274 = vstv %s266
    %vm275 = vcmp.lt.f32.partialorder %v272, %v274
    %vm276 = vcmp.lt.f32.partialorder %v273, %v274
    %s277 = sld [smem:[#allocation8 + $0x9]]
    %s278 = sld [smem:[#allocation10 + $0x9]]
    %v279 = vstv %s277
    %v280 = vstv %s278
    %v281 = vsel %vm275, %v279, %v280
    %v282 = vsel %vm276, %v279, %v280
    %s283 = sld [smem:[#allocation7 + $0x9]]
    %s284 = sld [smem:[#allocation2 + $0xa]]
    %s285 = sld [smem:[#allocation5 + $0xa]]
    %p286 = scmp.eq.s32.totalorder %s285, 0
    %s287 = scalar_select %p286, 1, 0
    %v288 = vstv %s287
    %vm289 = vcmp.eq.s32.totalorder %v288, 1
    %v290 = vsel %vm289, %v91, %v103
    %v291 = vsel %vm289, %v96, %v103
    %v292 = vstv %s284
    %vm293 = vcmp.lt.f32.partialorder %v290, %v292
    %vm294 = vcmp.lt.f32.partialorder %v291, %v292
    %s295 = sld [smem:[#allocation8 + $0xa]]
    %s296 = sld [smem:[#allocation10 + $0xa]]
    %v297 = vstv %s295
    %v298 = vstv %s296
    %v299 = vsel %vm293, %v297, %v298
    %v300 = vsel %vm294, %v297, %v298
    %s301 = sld [smem:[#allocation7 + $0xa]]
    %s302 = sld [smem:[#allocation2 + $0xb]]
    %s303 = sld [smem:[#allocation5 + $0xb]]
    %p304 = scmp.eq.s32.totalorder %s303, 0
    %s305 = scalar_select %p304, 1, 0
    %v306 = vstv %s305
    %vm307 = vcmp.eq.s32.totalorder %v306, 1
    %v308 = vsel %vm307, %v91, %v103
    %v309 = vsel %vm307, %v96, %v103
    %v310 = vstv %s302
    %vm311 = vcmp.lt.f32.partialorder %v308, %v310
    %vm312 = vcmp.lt.f32.partialorder %v309, %v310
    %s313 = sld [smem:[#allocation8 + $0xb]]
    %s314 = sld [smem:[#allocation10 + $0xb]]
    %v315 = vstv %s313
    %v316 = vstv %s314
    %v317 = vsel %vm311, %v315, %v316
    %v318 = vsel %vm312, %v315, %v316
    %s319 = sld [smem:[#allocation7 + $0xb]]
    %v320 = vstv %s139
    %vm321 = vcmp.eq.s32.totalorder %v120, %v320
    %vm322 = vcmp.eq.s32.totalorder %v121, %v320
    %v323 = vsel %vm321, %v137, %v120
    %v324 = vsel %vm322, %v138, %v121
    %v325 = vstv %s157
    %vm326 = vcmp.eq.s32.totalorder %v120, %v325
    %vm327 = vcmp.eq.s32.totalorder %v121, %v325
    %v328 = vsel %vm326, %v155, %v323
    %v329 = vsel %vm327, %v156, %v324
    %v330 = vstv %s175
    %vm331 = vcmp.eq.s32.totalorder %v120, %v330
    %vm332 = vcmp.eq.s32.totalorder %v121, %v330
    %v333 = vsel %vm331, %v173, %v328
    %v334 = vsel %vm332, %v174, %v329
    %v335 = vstv %s193
    %vm336 = vcmp.eq.s32.totalorder %v120, %v335
    %vm337 = vcmp.eq.s32.totalorder %v121, %v335
    %v338 = vsel %vm336, %v191, %v333
    %v339 = vsel %vm337, %v192, %v334
    %v340 = vstv %s211
    %vm341 = vcmp.eq.s32.totalorder %v120, %v340
    %vm342 = vcmp.eq.s32.totalorder %v121, %v340
    %v343 = vsel %vm341, %v209, %v338
    %v344 = vsel %vm342, %v210, %v339
    %v345 = vstv %s229
    %vm346 = vcmp.eq.s32.totalorder %v120, %v345
    %vm347 = vcmp.eq.s32.totalorder %v121, %v345
    %v348 = vsel %vm346, %v227, %v343
    %v349 = vsel %vm347, %v228, %v344
    %v350 = vstv %s247
    %vm351 = vcmp.eq.s32.totalorder %v120, %v350
    %vm352 = vcmp.eq.s32.totalorder %v121, %v350
    %v353 = vsel %vm351, %v245, %v348
    %v354 = vsel %vm352, %v246, %v349
    %v355 = vstv %s265
    %vm356 = vcmp.eq.s32.totalorder %v120, %v355
    %vm357 = vcmp.eq.s32.totalorder %v121, %v355
    %v358 = vsel %vm356, %v263, %v353
    %v359 = vsel %vm357, %v264, %v354
    %v360 = vstv %s283
    %vm361 = vcmp.eq.s32.totalorder %v120, %v360
    %vm362 = vcmp.eq.s32.totalorder %v121, %v360
    %v363 = vsel %vm361, %v281, %v358
    %v364 = vsel %vm362, %v282, %v359
    %v365 = vstv %s301
    %vm366 = vcmp.eq.s32.totalorder %v120, %v365
    %vm367 = vcmp.eq.s32.totalorder %v121, %v365
    %v368 = vsel %vm366, %v299, %v363
    %v369 = vsel %vm367, %v300, %v364
    %v370 = vstv %s319
    %vm371 = vcmp.eq.s32.totalorder %v120, %v370
    %vm372 = vcmp.eq.s32.totalorder %v121, %v370
    %v373 = vsel %vm371, %v317, %v368
    %v374 = vsel %vm372, %v318, %v369
    %vm375 = vcmp.eq.s32.totalorder %v373, %v320
    %vm376 = vcmp.eq.s32.totalorder %v374, %v320
    %v377 = vsel %vm375, %v137, %v120
    %v378 = vsel %vm376, %v138, %v121
    %vm379 = vcmp.eq.s32.totalorder %v373, %v325
    %vm380 = vcmp.eq.s32.totalorder %v374, %v325
    %v381 = vsel %vm379, %v155, %v377
    %v382 = vsel %vm380, %v156, %v378
    %vm383 = vcmp.eq.s32.totalorder %v373, %v330
    %vm384 = vcmp.eq.s32.totalorder %v374, %v330
    %v385 = vsel %vm383, %v173, %v381
    %v386 = vsel %vm384, %v174, %v382
    %vm387 = vcmp.eq.s32.totalorder %v373, %v335
    %vm388 = vcmp.eq.s32.totalorder %v374, %v335
    %v389 = vsel %vm387, %v191, %v385
    %v390 = vsel %vm388, %v192, %v386
    %vm391 = vcmp.eq.s32.totalorder %v373, %v340
    %vm392 = vcmp.eq.s32.totalorder %v374, %v340
    %v393 = vsel %vm391, %v209, %v389
    %v394 = vsel %vm392, %v210, %v390
    %vm395 = vcmp.eq.s32.totalorder %v373, %v345
    %vm396 = vcmp.eq.s32.totalorder %v374, %v345
    %v397 = vsel %vm395, %v227, %v393
    %v398 = vsel %vm396, %v228, %v394
    %vm399 = vcmp.eq.s32.totalorder %v373, %v350
    %vm400 = vcmp.eq.s32.totalorder %v374, %v350
    %v401 = vsel %vm399, %v245, %v397
    %v402 = vsel %vm400, %v246, %v398
    %vm403 = vcmp.eq.s32.totalorder %v373, %v355
    %vm404 = vcmp.eq.s32.totalorder %v374, %v355
    %v405 = vsel %vm403, %v263, %v401
    %v406 = vsel %vm404, %v264, %v402
    %vm407 = vcmp.eq.s32.totalorder %v373, %v360
    %vm408 = vcmp.eq.s32.totalorder %v374, %v360
    %v409 = vsel %vm407, %v281, %v405
    %v410 = vsel %vm408, %v282, %v406
    %vm411 = vcmp.eq.s32.totalorder %v373, %v365
    %vm412 = vcmp.eq.s32.totalorder %v374, %v365
    %v413 = vsel %vm411, %v299, %v409
    %v414 = vsel %vm412, %v300, %v410
    %vm415 = vcmp.eq.s32.totalorder %v373, %v370
    %vm416 = vcmp.eq.s32.totalorder %v374, %v370
    %v417 = vsel %vm415, %v317, %v413
    %v418 = vsel %vm416, %v318, %v414
    %vm419 = vcmp.eq.s32.totalorder %v417, %v320
    %vm420 = vcmp.eq.s32.totalorder %v418, %v320
    %v421 = vsel %vm419, %v137, %v120
    %v422 = vsel %vm420, %v138, %v121
    %vm423 = vcmp.eq.s32.totalorder %v417, %v325
    %vm424 = vcmp.eq.s32.totalorder %v418, %v325
    %v425 = vsel %vm423, %v155, %v421
    %v426 = vsel %vm424, %v156, %v422
    %vm427 = vcmp.eq.s32.totalorder %v417, %v330
    %vm428 = vcmp.eq.s32.totalorder %v418, %v330
    %v429 = vsel %vm427, %v173, %v425
    %v430 = vsel %vm428, %v174, %v426
    %vm431 = vcmp.eq.s32.totalorder %v417, %v335
    %vm432 = vcmp.eq.s32.totalorder %v418, %v335
    %v433 = vsel %vm431, %v191, %v429
    %v434 = vsel %vm432, %v192, %v430
    %vm435 = vcmp.eq.s32.totalorder %v417, %v340
    %vm436 = vcmp.eq.s32.totalorder %v418, %v340
    %v437 = vsel %vm435, %v209, %v433
    %v438 = vsel %vm436, %v210, %v434
    %vm439 = vcmp.eq.s32.totalorder %v417, %v345
    %vm440 = vcmp.eq.s32.totalorder %v418, %v345
    %v441 = vsel %vm439, %v227, %v437
    %v442 = vsel %vm440, %v228, %v438
    %vm443 = vcmp.eq.s32.totalorder %v417, %v350
    %vm444 = vcmp.eq.s32.totalorder %v418, %v350
    %v445 = vsel %vm443, %v245, %v441
    %v446 = vsel %vm444, %v246, %v442
    %vm447 = vcmp.eq.s32.totalorder %v417, %v355
    %vm448 = vcmp.eq.s32.totalorder %v418, %v355
    %v449 = vsel %vm447, %v263, %v445
    %v450 = vsel %vm448, %v264, %v446
    %vm451 = vcmp.eq.s32.totalorder %v417, %v360
    %vm452 = vcmp.eq.s32.totalorder %v418, %v360
    %v453 = vsel %vm451, %v281, %v449
    %v454 = vsel %vm452, %v282, %v450
    %vm455 = vcmp.eq.s32.totalorder %v417, %v365
    %vm456 = vcmp.eq.s32.totalorder %v418, %v365
    %v457 = vsel %vm455, %v299, %v453
    %v458 = vsel %vm456, %v300, %v454
    %vm459 = vcmp.eq.s32.totalorder %v417, %v370
    %vm460 = vcmp.eq.s32.totalorder %v418, %v370
    %v461 = vsel %vm459, %v317, %v457
    %v462 = vsel %vm460, %v318, %v458
    %vm463 = vcmp.eq.s32.totalorder %v461, %v320
    %vm464 = vcmp.eq.s32.totalorder %v462, %v320
    %v465 = vsel %vm463, %v137, %v120
    %v466 = vsel %vm464, %v138, %v121
    %vm467 = vcmp.eq.s32.totalorder %v461, %v325
    %vm468 = vcmp.eq.s32.totalorder %v462, %v325
    %v469 = vsel %vm467, %v155, %v465
    %v470 = vsel %vm468, %v156, %v466
    %vm471 = vcmp.eq.s32.totalorder %v461, %v330
    %vm472 = vcmp.eq.s32.totalorder %v462, %v330
    %v473 = vsel %vm471, %v173, %v469
    %v474 = vsel %vm472, %v174, %v470
    %vm475 = vcmp.eq.s32.totalorder %v461, %v335
    %vm476 = vcmp.eq.s32.totalorder %v462, %v335
    %v477 = vsel %vm475, %v191, %v473
    %v478 = vsel %vm476, %v192, %v474
    %vm479 = vcmp.eq.s32.totalorder %v461, %v340
    %vm480 = vcmp.eq.s32.totalorder %v462, %v340
    %v481 = vsel %vm479, %v209, %v477
    %v482 = vsel %vm480, %v210, %v478
    %vm483 = vcmp.eq.s32.totalorder %v461, %v345
    %vm484 = vcmp.eq.s32.totalorder %v462, %v345
    %v485 = vsel %vm483, %v227, %v481
    %v486 = vsel %vm484, %v228, %v482
    %vm487 = vcmp.eq.s32.totalorder %v461, %v350
    %vm488 = vcmp.eq.s32.totalorder %v462, %v350
    %v489 = vsel %vm487, %v245, %v485
    %v490 = vsel %vm488, %v246, %v486
    %vm491 = vcmp.eq.s32.totalorder %v461, %v355
    %vm492 = vcmp.eq.s32.totalorder %v462, %v355
    %v493 = vsel %vm491, %v263, %v489
    %v494 = vsel %vm492, %v264, %v490
    %vm495 = vcmp.eq.s32.totalorder %v461, %v360
    %vm496 = vcmp.eq.s32.totalorder %v462, %v360
    %v497 = vsel %vm495, %v281, %v493
    %v498 = vsel %vm496, %v282, %v494
    %vm499 = vcmp.eq.s32.totalorder %v461, %v365
    %vm500 = vcmp.eq.s32.totalorder %v462, %v365
    %v501 = vsel %vm499, %v299, %v497
    %v502 = vsel %vm500, %v300, %v498
    %vm503 = vcmp.eq.s32.totalorder %v461, %v370
    %vm504 = vcmp.eq.s32.totalorder %v462, %v370
    %v505 = vsel %vm503, %v317, %v501
    %v506 = vsel %vm504, %v318, %v502
    %vm507 = vcmp.eq.s32.totalorder %v505, %v320
    %vm508 = vcmp.eq.s32.totalorder %v506, %v320
    %v509 = vsel %vm507, %v137, %v120
    %v510 = vsel %vm508, %v138, %v121
    %vm511 = vcmp.eq.s32.totalorder %v505, %v325
    %vm512 = vcmp.eq.s32.totalorder %v506, %v325
    %v513 = vsel %vm511, %v155, %v509
    %v514 = vsel %vm512, %v156, %v510
    %vm515 = vcmp.eq.s32.totalorder %v505, %v330
    %vm516 = vcmp.eq.s32.totalorder %v506, %v330
    %v517 = vsel %vm515, %v173, %v513
    %v518 = vsel %vm516, %v174, %v514
    %vm519 = vcmp.eq.s32.totalorder %v505, %v335
    %vm520 = vcmp.eq.s32.totalorder %v506, %v335
    %v521 = vsel %vm519, %v191, %v517
    %v522 = vsel %vm520, %v192, %v518
    %vm523 = vcmp.eq.s32.totalorder %v505, %v340
    %vm524 = vcmp.eq.s32.totalorder %v506, %v340
    %v525 = vsel %vm523, %v209, %v521
    %v526 = vsel %vm524, %v210, %v522
    %vm527 = vcmp.eq.s32.totalorder %v505, %v345
    %vm528 = vcmp.eq.s32.totalorder %v506, %v345
    %v529 = vsel %vm527, %v227, %v525
    %v530 = vsel %vm528, %v228, %v526
    %vm531 = vcmp.eq.s32.totalorder %v505, %v350
    %vm532 = vcmp.eq.s32.totalorder %v506, %v350
    %v533 = vsel %vm531, %v245, %v529
    %v534 = vsel %vm532, %v246, %v530
    %vm535 = vcmp.eq.s32.totalorder %v505, %v355
    %vm536 = vcmp.eq.s32.totalorder %v506, %v355
    %v537 = vsel %vm535, %v263, %v533
    %v538 = vsel %vm536, %v264, %v534
    %vm539 = vcmp.eq.s32.totalorder %v505, %v360
    %vm540 = vcmp.eq.s32.totalorder %v506, %v360
    %v541 = vsel %vm539, %v281, %v537
    %v542 = vsel %vm540, %v282, %v538
    %vm543 = vcmp.eq.s32.totalorder %v505, %v365
    %vm544 = vcmp.eq.s32.totalorder %v506, %v365
    %v545 = vsel %vm543, %v299, %v541
    %v546 = vsel %vm544, %v300, %v542
    %vm547 = vcmp.eq.s32.totalorder %v505, %v370
    %vm548 = vcmp.eq.s32.totalorder %v506, %v370
    %v549 = vsel %vm547, %v317, %v545
    %v550 = vsel %vm548, %v318, %v546
    %v551 = vshra.s32 %v549, 16
    %v552 = vshra.s32 %v550, 16
    %553 = vst [vmem:[#allocation11] sm:$0xff] %v551
    %554 = vst [vmem:[#allocation11 + $0x8] sm:$0xff] %v552
    // Predicated region
    $region50: #{tpu_custom_call.1} parent=1 // pred_check
      _
    $region51: #{tpu_custom_call.1} parent=1 // pred_check_branch
      %556 = sbr.rel (0) target = $region53
    $region52: #{tpu_custom_call.1} parent=1 // pred_region
      %s558 = ssub.s32 256, 256
      %559 = vsyncadd [#allocation3], %s558
      %s560 = sshll.u32 [#allocation11], 4
      %s561 = int_to_ptr.vmem [resolvable:$true] %s560
      %566 = dma.vmem_to_hbm [thread:$0]  %s561, 256, %s7, [#allocation3], 128, 128, 8
    $region53: #{tpu_custom_call.1} parent=1 // pred_fallthru
      _
    // Predicated region
    $region54: #{tpu_custom_call.1} parent=1 // pred_check
      _
    $region55: #{tpu_custom_call.1} parent=1 // pred_check_branch
      %568 = sbr.rel (0) target = $region57
    $region56: #{tpu_custom_call.1} parent=1 // pred_region
      %569 = dma.done [#allocation3], 256
    $region57: #{tpu_custom_call.1} parent=1 // pred_fallthru
      _
    %570 = vsyncpa [#allocation3], 1
    %571 = vsyncpa [#allocation4], 1
    %572 = vsyncpa [#allocation6], 1
    %573 = vsyncpa [#allocation9], 1

</llo_original>
